<compile_context>
chip_gen: v7x
topology: tpu7x:2x2x1
jax: 0.10.0
libtpu: 0.0.40
codegen_flags: <defaults>
</compile_context>

<pallas_src>
import jax
import jax.numpy as jnp
from jax.experimental import pallas as pl
from jax.experimental.pallas import tpu as pltpu

# TODO(synk): type='SD'/'EG' Stable Diffusion / ControlNet inpainting pipelines and
#             the HED edge detector have no Pallas equivalent (external pretrained nets).
# TODO(synk): DIP model training (pl.Trainer.fit on self.dip_model) has no Pallas
#             equivalent; its output `result` is supplied as a kernel input instead.
# TODO(synk): s2pil / mask2pil PIL conversion+resize are host-side image ops, not kernels.


def _blend_hist_kernel(x_ref, cond_ref, res_ref, mask_ref, src_ref, fin_ref):
    # x/cond/res/src/fin: (C, tn) lane-dense tiles; mask: (1, tn), broadcast over C.
    m = mask_ref[...]                                    # validity mask (1 = keep)
    src = x_ref[...] * m + cond_ref[...] * (1.0 - m)     # source = in*mask + cond*(1-mask)
    src_ref[...] = src
    # final = mask * output + mask.logical_not() * result  (output == source here).
    # Exact (m == 0) test mirrors torch.logical_not: any nonzero m keeps m*src.
    fin_ref[...] = jnp.where(m == 0, res_ref[...], m * src)


def _blend_nohist_kernel(x_ref, res_ref, mask_ref, src_ref, fin_ref):
    # hist_fill=False path: source = input * mask (condition never read / DMA'd).
    m = mask_ref[...]
    src = x_ref[...] * m
    src_ref[...] = src
    fin_ref[...] = jnp.where(m == 0, res_ref[...], m * src)


def _round_up(x, m):
    return pl.cdiv(x, m) * m


def inpainter_msi_forward(inp, condition, mask, dip_result, *, hist_fill=True):
    """InpainterMSI.forward, type='DIP', msi=True numerical path.

    inp, condition, dip_result : (C, H, W) float
    mask                       : (H, W)    float (1 = valid, 0 = cloud/inpaint)
    dip_result stands in for self.dip_model.output()[0].
    Returns (source, final), both (C, H, W).
    """
    C, H, W = inp.shape
    dtype = inp.dtype
    bytes_per = jnp.dtype(dtype).itemsize
    N = H * W
    N128 = _round_up(N, 128)

    # Image-sized arrays flowing through the pipeline per step (inputs + 2 outputs).
    n_image_arrays = 5 if hist_fill else 4

    # Generation-aware VMEM budget (v7x has only 64 MiB VMEM per TensorCore).
    try:
        vmem_cap = pltpu.get_tpu_info().vmem_capacity_bytes
    except Exception:  # be robust if the query is unavailable
        vmem_cap = 64 << 20
    if vmem_cap <= (64 << 20):
        pipeline_budget, vmem_limit = 28 << 20, 36 << 20   # v7x
    else:
        pipeline_budget, vmem_limit = 56 << 20, 88 << 20   # v5e / v6e

    # Real double-buffered VMEM bytes per lane of tile width:
    # each (C, tn) block occupies round_up(C, 8) sublanes, the mask block 8.
    C8 = _round_up(C, 8)
    per_lane_bytes = 2 * (n_image_arrays * C8 + 8) * bytes_per
    max_tn = max(128, (pipeline_budget // per_lane_bytes) // 128 * 128)

    # Tile count: prefer >= 2 and even so v7x's two TensorCores both stream,
    # but never drop below one 128-lane tile.
    num_tiles = pl.cdiv(N128, max_tn)
    if num_tiles < 2:
        num_tiles = 2
    if num_tiles % 2 == 1:
        num_tiles += 1
    num_tiles = max(1, min(num_tiles, N128 // 128))
    tn = _round_up(pl.cdiv(N128, num_tiles), 128)
    grid = (pl.cdiv(N, tn),)

    # Free, copy-less reshapes only (contiguous row-major); no pad, no output slice.
    x2 = inp.reshape(C, N)
    res2 = dip_result.reshape(C, N)
    m2 = mask.reshape(1, N).astype(dtype)

    img_spec = pl.BlockSpec((C, tn), lambda j: (0, j))
    mask_spec = pl.BlockSpec((1, tn), lambda j: (0, j))

    out_shape = (jax.ShapeDtypeStruct((C, N), dtype),
                 jax.ShapeDtypeStruct((C, N), dtype))
    out_specs = (img_spec, img_spec)

    compiler_params = pltpu.CompilerParams(
        dimension_semantics=("parallel",),
        vmem_limit_bytes=vmem_limit,
    )
    cost = pl.CostEstimate(
        flops=6 * C * N,
        transcendentals=0,
        bytes_accessed=(n_image_arrays * C * N + N) * bytes_per,
    )

    if hist_fill:
        cond2 = condition.reshape(C, N)
        src2, fin2 = pl.pallas_call(
            _blend_hist_kernel,
            out_shape=out_shape,
            grid=grid,
            in_specs=[img_spec, img_spec, img_spec, mask_spec],
            out_specs=out_specs,
            compiler_params=compiler_params,
            cost_estimate=cost,
        )(x2, cond2, res2, m2)
    else:
        src2, fin2 = pl.pallas_call(
            _blend_nohist_kernel,
            out_shape=out_shape,
            grid=grid,
            in_specs=[img_spec, img_spec, mask_spec],
            out_specs=out_specs,
            compiler_params=compiler_params,
            cost_estimate=cost,
        )(x2, res2, m2)

    return src2.reshape(C, H, W), fin2.reshape(C, H, W)


if __name__ == "__main__":
    key = jax.random.PRNGKey(0)
    k1, k2, k3, k4 = jax.random.split(key, 4)

    # Small multispectral image: 6 bands, 16x16 spatial.
    C, H, W = 6, 16, 16
    inp = jax.random.uniform(k1, (C, H, W), dtype=jnp.float32)
    condition = jax.random.uniform(k2, (C, H, W), dtype=jnp.float32)   # historical cloud-free image
    dip_result = jax.random.uniform(k3, (C, H, W), dtype=jnp.float32)  # surrogate DIP output
    mask = (jax.random.uniform(k4, (H, W)) > 0.3).astype(jnp.float32)  # 1 = valid, 0 = cloud

    fwd = jax.jit(inpainter_msi_forward, static_argnames=("hist_fill",))

    # hist_fill=True path
    src, final = fwd(inp, condition, mask, dip_result, hist_fill=True)
    jax.block_until_ready((src, final))
    src_ref = inp * mask[None] + condition * (1.0 - mask[None])
    fin_ref = mask[None] * src_ref + (mask[None] == 0) * dip_result
    assert jnp.allclose(src, src_ref, atol=1e-6), "source mismatch (hist_fill=True)"
    assert jnp.allclose(final, fin_ref, atol=1e-6), "final mismatch (hist_fill=True)"

    # hist_fill=False path (condition never read inside the kernel)
    src_nh, final_nh = fwd(inp, condition, mask, dip_result, hist_fill=False)
    jax.block_until_ready((src_nh, final_nh))
    src_ref_nh = inp * mask[None]
    fin_ref_nh = mask[None] * src_ref_nh + (mask[None] == 0) * dip_result
    assert jnp.allclose(src_nh, src_ref_nh, atol=1e-6), "source mismatch (hist_fill=False)"
    assert jnp.allclose(final_nh, fin_ref_nh, atol=1e-6), "final mismatch (hist_fill=False)"

    print("KERNEL_OK")
</pallas_src>

<mosaic_0001>
module attributes {stable_mosaic.version = 11 : i64} {
  func.func @_blend_hist_kernel(%arg0: i32, %arg1: memref<6x128xf32, #tpu.memory_space<vmem>>, %arg2: memref<6x128xf32, #tpu.memory_space<vmem>>, %arg3: memref<6x128xf32, #tpu.memory_space<vmem>>, %arg4: memref<1x128xf32, #tpu.memory_space<vmem>>, %arg5: memref<6x128xf32, #tpu.memory_space<vmem>>, %arg6: memref<6x128xf32, #tpu.memory_space<vmem>>) attributes {dimension_semantics = [#tpu.dimension_semantics<parallel>], iteration_bounds = array<i64: 2>, scalar_prefetch = 0 : i64, scratch_operands = 0 : i64, tpu.core_type = #tpu.core_type<tc>, window_params = [{transform_indices = @transform_0, window_bounds = array<i64: 6, 128>}, {transform_indices = @transform_1, window_bounds = array<i64: 6, 128>}, {transform_indices = @transform_2, window_bounds = array<i64: 6, 128>}, {transform_indices = @transform_3, window_bounds = array<i64: 1, 128>}, {transform_indices = @transform_4, window_bounds = array<i64: 6, 128>}, {transform_indices = @transform_5, window_bounds = array<i64: 6, 128>}]} {
    %c0 = arith.constant 0 : index
    %c0_0 = arith.constant 0 : index
    %0 = vector.load %arg4[%c0, %c0_0] : memref<1x128xf32, #tpu.memory_space<vmem>>, vector<1x128xf32>
    %c0_1 = arith.constant 0 : index
    %c0_2 = arith.constant 0 : index
    %1 = vector.load %arg1[%c0_1, %c0_2] : memref<6x128xf32, #tpu.memory_space<vmem>>, vector<6x128xf32>
    %2 = vector.broadcast %0 : vector<1x128xf32> to vector<6x128xf32>
    %3 = arith.mulf %1, %2 : vector<6x128xf32>
    %c0_3 = arith.constant 0 : index
    %c0_4 = arith.constant 0 : index
    %4 = vector.load %arg2[%c0_3, %c0_4] : memref<6x128xf32, #tpu.memory_space<vmem>>, vector<6x128xf32>
    %cst = arith.constant 1.000000e+00 : f32
    %5 = vector.broadcast %cst : f32 to vector<1x128xf32>
    %6 = arith.subf %5, %0 : vector<1x128xf32>
    %7 = vector.broadcast %6 : vector<1x128xf32> to vector<6x128xf32>
    %8 = arith.mulf %4, %7 : vector<6x128xf32>
    %9 = arith.addf %3, %8 : vector<6x128xf32>
    %c0_5 = arith.constant 0 : index
    %c0_6 = arith.constant 0 : index
    %10 = vector.load %arg5[%c0_5, %c0_6] : memref<6x128xf32, #tpu.memory_space<vmem>>, vector<6x128xf32>
    tpu.vector_store %arg5[%c0_5, %c0_6], %9 {strides = array<i32>} : memref<6x128xf32, #tpu.memory_space<vmem>>, vector<6x128xf32>,
    %cst_7 = arith.constant 0.000000e+00 : f32
    %11 = vector.broadcast %cst_7 : f32 to vector<1x128xf32>
    %12 = arith.cmpf oeq, %0, %11 : vector<1x128xf32>
    %c0_8 = arith.constant 0 : index
    %c0_9 = arith.constant 0 : index
    %13 = vector.load %arg3[%c0_8, %c0_9] : memref<6x128xf32, #tpu.memory_space<vmem>>, vector<6x128xf32>
    %14 = vector.broadcast %0 : vector<1x128xf32> to vector<6x128xf32>
    %15 = arith.mulf %14, %9 : vector<6x128xf32>
    %16 = vector.shape_cast %12 : vector<1x128xi1> to vector<1x128xi1>
    %17 = vector.broadcast %16 : vector<1x128xi1> to vector<6x128xi1>
    %18 = arith.select %17, %13, %15 : vector<6x128xi1>, vector<6x128xf32>
    %c0_10 = arith.constant 0 : index
    %c0_11 = arith.constant 0 : index
    %19 = vector.load %arg6[%c0_10, %c0_11] : memref<6x128xf32, #tpu.memory_space<vmem>>, vector<6x128xf32>
    tpu.vector_store %arg6[%c0_10, %c0_11], %18 {strides = array<i32>} : memref<6x128xf32, #tpu.memory_space<vmem>>, vector<6x128xf32>,
    return
  }
  func.func @transform_0(%arg0: i32) -> (i32, i32) {
    %c0_i32 = arith.constant 0 : i32
    %c0_i32_0 = arith.constant 0 : i32
    return %c0_i32, %arg0 : i32, i32
  }
  func.func @transform_1(%arg0: i32) -> (i32, i32) {
    %c0_i32 = arith.constant 0 : i32
    %c0_i32_0 = arith.constant 0 : i32
    return %c0_i32, %arg0 : i32, i32
  }
  func.func @transform_2(%arg0: i32) -> (i32, i32) {
    %c0_i32 = arith.constant 0 : i32
    %c0_i32_0 = arith.constant 0 : i32
    return %c0_i32, %arg0 : i32, i32
  }
  func.func @transform_3(%arg0: i32) -> (i32, i32) {
    %c0_i32 = arith.constant 0 : i32
    %c0_i32_0 = arith.constant 0 : i32
    return %c0_i32, %arg0 : i32, i32
  }
  func.func @transform_4(%arg0: i32) -> (i32, i32) {
    %c0_i32 = arith.constant 0 : i32
    %c0_i32_0 = arith.constant 0 : i32
    return %c0_i32, %arg0 : i32, i32
  }
  func.func @transform_5(%arg0: i32) -> (i32, i32) {
    %c0_i32 = arith.constant 0 : i32
    %c0_i32_0 = arith.constant 0 : i32
    return %c0_i32, %arg0 : i32, i32
  }
}

</mosaic_0001>

<llo_original>
// kernel: inpainter_msi_forward.1
$region0: #{inpainter_msi_forward.1}
  #allocation0 [shape = 'u32[]', space=smem, size = 0x4, offset = 0x4, fixed_abs, tag = 'smem constant byte address 0x4 - core index']
  #allocation1 [shape = 'u32[144,128]{1,0:T(1,128)}', space=vmem, size = 0x12000, scoped, tag = 'internal scratch']
  %s0 = inlined_call_operand.vmem [shape: f32[6,256], index: 0, kind: input, shape index: {}]
  %s1 = inlined_call_operand.vmem [shape: f32[6,256], index: 1, kind: input, shape index: {}]
  %s2 = inlined_call_operand.vmem [shape: f32[6,256], index: 2, kind: input, shape index: {}]
  %s3 = inlined_call_operand.vmem [shape: f32[1,256], index: 3, kind: input, shape index: {}]
  %s4 = inlined_call_operand.vmem [shape: f32[6,256], index: 4, kind: output, shape index: {0}]
  %s5 = inlined_call_operand.vmem [shape: f32[6,256], index: 5, kind: output, shape index: {1}]
  %6 = xla_tuple %s4, %s5
  %s7 = sld [smem:[#allocation0]]
  $region57: #{inpainter_msi_forward.1} parent=0
    _
  %s9 = ssub.s32 1, %s7
  %s10 = scalar_select 0, %s9, %s7
  loop: start=0, step=1, limit=4
  $region2: #{inpainter_msi_forward.1} parent=0 // loop_pre_header
    _
  $region3: #{inpainter_msi_forward.1} parent=0 // loop_header
    %s12 = sphi 0, %s16
    %p13 = scmp.ge.s32.totalorder %s12, 4
    %s22 = sphi 0, %s24
    %s25 = sphi 0, %s22
    %s26 = sphi 0, %s25
    %s42 = sphi 0, %s26
    %s48 = sphi 0, %s50
    %s51 = sphi 0, %s48
    %s52 = sphi 0, %s51
    %s68 = sphi 0, %s52
    %s74 = sphi 0, %s76
    %s77 = sphi 0, %s74
    %s78 = sphi 0, %s77
    %s94 = sphi 0, %s78
    %s100 = sphi 0, %s102
    %s103 = sphi 0, %s100
    %s104 = sphi 0, %s103
    %s120 = sphi 0, %s104
    %s126 = sphi 0, %s128
    %s129 = sphi 0, %s126
    %s130 = sphi 0, %s129
    %s146 = sphi 0, %s130
    %s152 = sphi 0, %s154
    %s155 = sphi 0, %s152
    %s156 = sphi 0, %s155
    %s172 = sphi 0, %s156
  $region4: #{inpainter_msi_forward.1} parent=0 // loop_header_branch
    %15 = sbr.rel (%p13) target = $region8
  $region5: #{inpainter_msi_forward.1} parent=0 // loop_body
    %s17 = ssub.s32 %s12, 1
    %s18 = ssub.s32 %s12, 2
    %s19 = sadd.s32 %s12, 1
    %s20 = ssub.s32 %s12, %s19
    %p21 = scmp.eq.s32.totalorder %s20, 0
    %s23 = sadd.s32 %s22, 1
    %s24 = scalar_select %p21, %s22, %s23
    %p27 = pneg %p21
    %p28 = scmp.eq.s32.totalorder %s12, 1
    %p29 = por %p27, %p28
    %p30 = scmp.ne.s32.totalorder %s22, %s25
    %p31 = scmp.eq.s32.totalorder %s12, 0
    %p32 = por %p30, %p31
    %p33 = scmp.ne.s32.totalorder %s22, %s25
    %p34 = scmp.eq.s32.totalorder %s17, 1
    %p35 = por %p33, %p34
    %p36 = scmp.ne.s32.totalorder %s25, %s26
    %p37 = scmp.eq.s32.totalorder %s17, 0
    %p38 = por %p36, %p37
    %p39 = scmp.ne.s32.totalorder %s25, %s26
    %p40 = scmp.eq.s32.totalorder %s18, 1
    %p41 = por %p39, %p40
    %p43 = scmp.ne.s32.totalorder %s26, %s42
    %p44 = scmp.eq.s32.totalorder %s18, 0
    %p45 = por %p43, %p44
    %s46 = ssub.s32 %s12, %s19
    %p47 = scmp.eq.s32.totalorder %s46, 0
    %s49 = sadd.s32 %s48, 1
    %s50 = scalar_select %p47, %s48, %s49
    %p53 = pneg %p47
    %p54 = scmp.eq.s32.totalorder %s12, 1
    %p55 = por %p53, %p54
    %p56 = scmp.ne.s32.totalorder %s48, %s51
    %p57 = scmp.eq.s32.totalorder %s12, 0
    %p58 = por %p56, %p57
    %p59 = scmp.ne.s32.totalorder %s48, %s51
    %p60 = scmp.eq.s32.totalorder %s17, 1
    %p61 = por %p59, %p60
    %p62 = scmp.ne.s32.totalorder %s51, %s52
    %p63 = scmp.eq.s32.totalorder %s17, 0
    %p64 = por %p62, %p63
    %p65 = scmp.ne.s32.totalorder %s51, %s52
    %p66 = scmp.eq.s32.totalorder %s18, 1
    %p67 = por %p65, %p66
    %p69 = scmp.ne.s32.totalorder %s52, %s68
    %p70 = scmp.eq.s32.totalorder %s18, 0
    %p71 = por %p69, %p70
    %s72 = ssub.s32 %s12, %s19
    %p73 = scmp.eq.s32.totalorder %s72, 0
    %s75 = sadd.s32 %s74, 1
    %s76 = scalar_select %p73, %s74, %s75
    %p79 = pneg %p73
    %p80 = scmp.eq.s32.totalorder %s12, 1
    %p81 = por %p79, %p80
    %p82 = scmp.ne.s32.totalorder %s74, %s77
    %p83 = scmp.eq.s32.totalorder %s12, 0
    %p84 = por %p82, %p83
    %p85 = scmp.ne.s32.totalorder %s74, %s77
    %p86 = scmp.eq.s32.totalorder %s17, 1
    %p87 = por %p85, %p86
    %p88 = scmp.ne.s32.totalorder %s77, %s78
    %p89 = scmp.eq.s32.totalorder %s17, 0
    %p90 = por %p88, %p89
    %p91 = scmp.ne.s32.totalorder %s77, %s78
    %p92 = scmp.eq.s32.totalorder %s18, 1
    %p93 = por %p91, %p92
    %p95 = scmp.ne.s32.totalorder %s78, %s94
    %p96 = scmp.eq.s32.totalorder %s18, 0
    %p97 = por %p95, %p96
    %s98 = ssub.s32 %s12, %s19
    %p99 = scmp.eq.s32.totalorder %s98, 0
    %s101 = sadd.s32 %s100, 1
    %s102 = scalar_select %p99, %s100, %s101
    %p105 = pneg %p99
    %p106 = scmp.eq.s32.totalorder %s12, 1
    %p107 = por %p105, %p106
    %p108 = scmp.ne.s32.totalorder %s100, %s103
    %p109 = scmp.eq.s32.totalorder %s12, 0
    %p110 = por %p108, %p109
    %p111 = scmp.ne.s32.totalorder %s100, %s103
    %p112 = scmp.eq.s32.totalorder %s17, 1
    %p113 = por %p111, %p112
    %p114 = scmp.ne.s32.totalorder %s103, %s104
    %p115 = scmp.eq.s32.totalorder %s17, 0
    %p116 = por %p114, %p115
    %p117 = scmp.ne.s32.totalorder %s103, %s104
    %p118 = scmp.eq.s32.totalorder %s18, 1
    %p119 = por %p117, %p118
    %p121 = scmp.ne.s32.totalorder %s104, %s120
    %p122 = scmp.eq.s32.totalorder %s18, 0
    %p123 = por %p121, %p122
    %s124 = ssub.s32 %s12, %s19
    %p125 = scmp.eq.s32.totalorder %s124, 0
    %s127 = sadd.s32 %s126, 1
    %s128 = scalar_select %p125, %s126, %s127
    %p131 = pneg %p125
    %p132 = scmp.eq.s32.totalorder %s12, 1
    %p133 = por %p131, %p132
    %p134 = scmp.ne.s32.totalorder %s126, %s129
    %p135 = scmp.eq.s32.totalorder %s12, 0
    %p136 = por %p134, %p135
    %p137 = scmp.ne.s32.totalorder %s126, %s129
    %p138 = scmp.eq.s32.totalorder %s17, 1
    %p139 = por %p137, %p138
    %p140 = scmp.ne.s32.totalorder %s129, %s130
    %p141 = scmp.eq.s32.totalorder %s17, 0
    %p142 = por %p140, %p141
    %p143 = scmp.ne.s32.totalorder %s129, %s130
    %p144 = scmp.eq.s32.totalorder %s18, 1
    %p145 = por %p143, %p144
    %p147 = scmp.ne.s32.totalorder %s130, %s146
    %p148 = scmp.eq.s32.totalorder %s18, 0
    %p149 = por %p147, %p148
    %s150 = ssub.s32 %s12, %s19
    %p151 = scmp.eq.s32.totalorder %s150, 0
    %s153 = sadd.s32 %s152, 1
    %s154 = scalar_select %p151, %s152, %s153
    %p157 = pneg %p151
    %p158 = scmp.eq.s32.totalorder %s12, 1
    %p159 = por %p157, %p158
    %p160 = scmp.ne.s32.totalorder %s152, %s155
    %p161 = scmp.eq.s32.totalorder %s12, 0
    %p162 = por %p160, %p161
    %p163 = scmp.ne.s32.totalorder %s152, %s155
    %p164 = scmp.eq.s32.totalorder %s17, 1
    %p165 = por %p163, %p164
    %p166 = scmp.ne.s32.totalorder %s155, %s156
    %p167 = scmp.eq.s32.totalorder %s17, 0
    %p168 = por %p166, %p167
    %p169 = scmp.ne.s32.totalorder %s155, %s156
    %p170 = scmp.eq.s32.totalorder %s18, 1
    %p171 = por %p169, %p170
    %p173 = scmp.ne.s32.totalorder %s156, %s172
    %p174 = scmp.eq.s32.totalorder %s18, 0
    %p175 = por %p173, %p174
    %p176 = scmp.le.s32.totalorder 1, %s12
    %p177 = scmp.lt.s32.totalorder %s12, 3
    %p178 = pnand %p176, %p177
    %p179 = pneg %p178
    // Predicated region
    $region9: #{inpainter_msi_forward.1} parent=5 // pred_check
      _
    $region10: #{inpainter_msi_forward.1} parent=5 // pred_check_branch
      %181 = sbr.rel (%p178) target = $region12
    $region11: #{inpainter_msi_forward.1} parent=5 // pred_region
      %s182 = ssub.s32 %s12, 1
    $region12: #{inpainter_msi_forward.1} parent=5 // pred_fallthru
      _
    %p183 = scmp.lt.s32.totalorder %s12, 2
    // Predicated region
    $region13: #{inpainter_msi_forward.1} parent=5 // pred_check
      %p184 = pneg %p183
    $region14: #{inpainter_msi_forward.1} parent=5 // pred_check_branch
      %186 = sbr.rel (%p184) target = $region16
    $region15: #{inpainter_msi_forward.1} parent=5 // pred_region
      // Predicated region
      $region17: #{inpainter_msi_forward.1} parent=15 // pred_check
        %p187 = pneg %p32
      $region18: #{inpainter_msi_forward.1} parent=15 // pred_check_branch
        %189 = sbr.rel (%p187) target = $region20
      $region19: #{inpainter_msi_forward.1} parent=15 // pred_region
        %p190 = scmp.lt.s32.totalorder %s12, 1
        %s191 = scalar_select %p190, %s12, 1
        %s192 = smul.addr %s191, 8
        %s193 = scalar_lea.vmem %s0, %s192
      $region20: #{inpainter_msi_forward.1} parent=15 // pred_fallthru
        _
      // Predicated region
      $region21: #{inpainter_msi_forward.1} parent=15 // pred_check
        %p194 = pneg %p58
      $region22: #{inpainter_msi_forward.1} parent=15 // pred_check_branch
        %196 = sbr.rel (%p194) target = $region24
      $region23: #{inpainter_msi_forward.1} parent=15 // pred_region
        %p197 = scmp.lt.s32.totalorder %s12, 1
        %s198 = scalar_select %p197, %s12, 1
        %s199 = smul.addr %s198, 8
        %s200 = scalar_lea.vmem %s1, %s199
      $region24: #{inpainter_msi_forward.1} parent=15 // pred_fallthru
        _
      // Predicated region
      $region25: #{inpainter_msi_forward.1} parent=15 // pred_check
        %p201 = pneg %p84
      $region26: #{inpainter_msi_forward.1} parent=15 // pred_check_branch
        %203 = sbr.rel (%p201) target = $region28
      $region27: #{inpainter_msi_forward.1} parent=15 // pred_region
        %p204 = scmp.lt.s32.totalorder %s12, 1
        %s205 = scalar_select %p204, %s12, 1
        %s206 = smul.addr %s205, 8
        %s207 = scalar_lea.vmem %s2, %s206
      $region28: #{inpainter_msi_forward.1} parent=15 // pred_fallthru
        _
      // Predicated region
      $region29: #{inpainter_msi_forward.1} parent=15 // pred_check
        %p208 = pneg %p110
      $region30: #{inpainter_msi_forward.1} parent=15 // pred_check_branch
        %210 = sbr.rel (%p208) target = $region32
      $region31: #{inpainter_msi_forward.1} parent=15 // pred_region
        %p211 = scmp.lt.s32.totalorder %s12, 1
        %s212 = scalar_select %p211, %s12, 1
        %s213 = scalar_lea.vmem %s3, %s212
      $region32: #{inpainter_msi_forward.1} parent=15 // pred_fallthru
        _
    $region16: #{inpainter_msi_forward.1} parent=5 // pred_fallthru
      _
    %p214 = scmp.le.s32.totalorder 1, %s12
    %p215 = scmp.lt.s32.totalorder %s12, 3
    %p216 = pnand %p214, %p215
    %p217 = pneg %p216
    // Predicated region
    $region33: #{inpainter_msi_forward.1} parent=5 // pred_check
      _
    $region34: #{inpainter_msi_forward.1} parent=5 // pred_check_branch
      %219 = sbr.rel (%p216) target = $region36
    $region35: #{inpainter_msi_forward.1} parent=5 // pred_region
      %s220 = ssub.s32 %s12, 1
      %p221 = scmp.lt.s32.totalorder %s17, 1
      %s222 = scalar_select %p221, %s17, 1
      %s223 = smul.addr %s222, 8
      %s224 = scalar_lea.vmem %s0, %s223
      %p225 = pneg %p38
      %p226 = pneg %p35
      %p227 = scmp.lt.s32.totalorder %s17, 1
      %s228 = scalar_select %p227, %s17, 1
      %s229 = smul.addr %s228, 8
      %s230 = scalar_lea.vmem %s1, %s229
      %p231 = pneg %p64
      %p232 = pneg %p61
      %p233 = scmp.lt.s32.totalorder %s17, 1
      %s234 = scalar_select %p233, %s17, 1
      %s235 = smul.addr %s234, 8
      %s236 = scalar_lea.vmem %s2, %s235
      %p237 = pneg %p90
      %p238 = pneg %p87
      %p239 = scmp.lt.s32.totalorder %s17, 1
      %s240 = scalar_select %p239, %s17, 1
      %s241 = scalar_lea.vmem %s3, %s240
      %p242 = pneg %p116
      %p243 = pneg %p113
      %p244 = pneg %p142
      %p245 = pneg %p139
      %p246 = scmp.lt.s32.totalorder %s17, 1
      %s247 = scalar_select %p246, %s17, 1
      %s248 = smul.addr %s247, 8
      %s249 = scalar_lea.vmem %s4, %s248
      %p250 = pneg %p168
      %p251 = pneg %p165
      %p252 = scmp.lt.s32.totalorder %s17, 1
      %s253 = scalar_select %p252, %s17, 1
      %s254 = smul.addr %s253, 8
      %s255 = scalar_lea.vmem %s5, %s254
      %p256 = scmp.lt.s32.totalorder %s17, 1
      %s257 = scalar_select %p256, %s17, 1
      %s258 = smul.addr %s257, 8
      %s259 = scalar_lea.vmem %s0, %s258
      %p260 = scmp.lt.s32.totalorder %s17, 1
      %s261 = scalar_select %p260, %s17, 1
      %s262 = smul.addr %s261, 8
      %s263 = scalar_lea.vmem %s1, %s262
      %p264 = scmp.lt.s32.totalorder %s17, 1
      %s265 = scalar_select %p264, %s17, 1
      %s266 = smul.addr %s265, 8
      %s267 = scalar_lea.vmem %s2, %s266
      %p268 = scmp.lt.s32.totalorder %s17, 1
      %s269 = scalar_select %p268, %s17, 1
      %s270 = scalar_lea.vmem %s3, %s269
      %p271 = scmp.lt.s32.totalorder %s17, 1
      %s272 = scalar_select %p271, %s17, 1
      %s273 = smul.addr %s272, 8
      %s274 = scalar_lea.vmem %s4, %s273
      %p275 = scmp.lt.s32.totalorder %s17, 1
      %s276 = scalar_select %p275, %s17, 1
      %s277 = smul.addr %s276, 8
      %s278 = scalar_lea.vmem %s5, %s277
      %v279 = vld [vmem:[%s270] sm:$0x1]
      %v280 = vld [vmem:[%s259] sm:$0x3f]
      %v282 = vlaneseq
      %v283 = vshrl.u32 %v282, 7
      %v284 = vsub.s32 0, %v283
      %v285 = vrot.slane %v279, %v284
      %v287 = vmul.f32 %v280, %v285
      %v288 = vld [vmem:[%s263] sm:$0x3f]
      %v289 = vsub.f32 1.0, %v279
      %v291 = vlaneseq
      %v292 = vshrl.u32 %v291, 7
      %v293 = vsub.s32 0, %v292
      %v294 = vrot.slane %v289, %v293
      %v296 = vmul.f32 %v288, %v294
      %v297 = vadd.f32 %v287, %v296
      %298 = vst [vmem:[%s274] sm:$0x3f] %v297
      %vm299 = vcmp.eq.f32.partialorder %v279, 0.0
      %v300 = vld [vmem:[%s267] sm:$0x3f]
      %v301 = vmul.f32 %v285, %v297
      %v302 = vsel %vm299, 1, 0
      %v303 = vlaneseq
      %v304 = vshrl.u32 %v303, 7
      %v305 = vsub.s32 0, %v304
      %v306 = vrot.slane %v302, %v305
      %vm307 = vcmp.eq.s32.totalorder %v306, 1
      %v308 = vsel %vm307, %v300, %v301
      %309 = vst [vmem:[%s278] sm:$0x3f] %v308
      %p310 = scmp.lt.s32.totalorder %s17, 1
      %s311 = scalar_select %p310, %s17, 1
      %s312 = smul.addr %s311, 8
      %s313 = scalar_lea.vmem %s4, %s312
      %p314 = scmp.lt.s32.totalorder %s17, 1
      %s315 = scalar_select %p314, %s17, 1
      %s316 = smul.addr %s315, 8
      %s317 = scalar_lea.vmem %s5, %s316
      // Predicated region
      $region37: #{inpainter_msi_forward.1} parent=35 // pred_check
        %p318 = pneg %p139
      $region38: #{inpainter_msi_forward.1} parent=35 // pred_check_branch
        %320 = sbr.rel (%p318) target = $region40
      $region39: #{inpainter_msi_forward.1} parent=35 // pred_region
        _
      $region40: #{inpainter_msi_forward.1} parent=35 // pred_fallthru
        _
      // Predicated region
      $region41: #{inpainter_msi_forward.1} parent=35 // pred_check
        %p321 = pneg %p165
      $region42: #{inpainter_msi_forward.1} parent=35 // pred_check_branch
        %323 = sbr.rel (%p321) target = $region44
      $region43: #{inpainter_msi_forward.1} parent=35 // pred_region
        _
      $region44: #{inpainter_msi_forward.1} parent=35 // pred_fallthru
        _
    $region36: #{inpainter_msi_forward.1} parent=5 // pred_fallthru
      _
    %p324 = scmp.le.s32.totalorder 2, %s12
    // Predicated region
    $region45: #{inpainter_msi_forward.1} parent=5 // pred_check
      %p325 = pneg %p324
    $region46: #{inpainter_msi_forward.1} parent=5 // pred_check_branch
      %327 = sbr.rel (%p325) target = $region48
    $region47: #{inpainter_msi_forward.1} parent=5 // pred_region
      %s328 = ssub.s32 %s12, 2
      // Predicated region
      $region49: #{inpainter_msi_forward.1} parent=47 // pred_check
        %p329 = pneg %p145
      $region50: #{inpainter_msi_forward.1} parent=47 // pred_check_branch
        %331 = sbr.rel (%p329) target = $region52
      $region51: #{inpainter_msi_forward.1} parent=47 // pred_region
        %p332 = scmp.lt.s32.totalorder %s18, 1
        %s333 = scalar_select %p332, %s18, 1
        %s334 = smul.addr %s333, 8
        %s335 = scalar_lea.vmem %s4, %s334
      $region52: #{inpainter_msi_forward.1} parent=47 // pred_fallthru
        _
      // Predicated region
      $region53: #{inpainter_msi_forward.1} parent=47 // pred_check
        %p336 = pneg %p171
      $region54: #{inpainter_msi_forward.1} parent=47 // pred_check_branch
        %338 = sbr.rel (%p336) target = $region56
      $region55: #{inpainter_msi_forward.1} parent=47 // pred_region
        %p339 = scmp.lt.s32.totalorder %s18, 1
        %s340 = scalar_select %p339, %s18, 1
        %s341 = smul.addr %s340, 8
        %s342 = scalar_lea.vmem %s5, %s341
      $region56: #{inpainter_msi_forward.1} parent=47 // pred_fallthru
        _
    $region48: #{inpainter_msi_forward.1} parent=5 // pred_fallthru
      _
  $region6: #{inpainter_msi_forward.1} parent=0 // loop_footer
    %s16 = sadd.s32 1, %s12
  $region7: #{inpainter_msi_forward.1} parent=0 // loop_footer_branch
    %11 = sbr.rel target = $region3
  $region8: #{inpainter_msi_forward.1} parent=0 // loop_exit
    _

</llo_original>
